<compile_context>
chip_gen: v7x
topology: tpu7x:2x2x1
jax: 0.10.0
libtpu: 0.0.40
codegen_flags: <defaults>
</compile_context>

<pallas_src>
import jax
import jax.numpy as jnp
from jax.experimental import pallas as pl
from jax.experimental.pallas import tpu as pltpu


def attention_kernel(zf_ref, w1b_ref, b1t_ref, w2b_ref, r_ref, s_ref,
                     out_ref, beta_ref):
    # zf_ref  : (TB, N*D)   lane-dense block of flattened views
    # w1b_ref : (N*D, N*H)  block-diagonal first Linear weight (kron(I_N, w1))
    # b1t_ref : (1, N*H)    first Linear bias tiled across views
    # w2b_ref : (N*H, N)    block-structured second Linear weight
    # r_ref   : (N, N*D)    0/1 expansion matrix (repeat view weight D times)
    # s_ref   : (N*D, D)    0/1 summation matrix (sum over views)
    # out_ref : (TB, D)
    # beta_ref: (TB, N)
    zf = zf_ref[...]                                     # native dtype, no copy/upcast

    # Fused projection over all views: one MXU matmul (K=N*D, N=N*H).
    h = jnp.tanh(
        jnp.dot(zf, w1b_ref[...], preferred_element_type=jnp.float32)
        + b1t_ref[...])                                  # (TB, N*H) f32
    logits = jnp.dot(h, w2b_ref[...],
                     preferred_element_type=jnp.float32)  # (TB, N)

    # Stable softmax over the views (lane) axis; keep it unnormalized and
    # apply a single reciprocal at the end.
    m = jnp.max(logits, axis=-1, keepdims=True)          # (TB, 1)
    e = jnp.exp(logits - m)                              # (TB, N)
    denom = jnp.sum(e, axis=-1, keepdims=True)           # (TB, 1), >= 1
    inv = pl.reciprocal(denom, approx=True)              # EUP vrcp (free slot)
    inv = inv * (2.0 - denom * inv)                      # one Newton step -> ~exact

    # Weighted sum over views via constant 0/1 matmuls (idle MXU slots):
    #   e_exp[b, n*D+d] = e[b, n];  acc[b, d] = sum_n e_exp[b, n*D+d] * zf[b, n*D+d]
    e_exp = jnp.dot(e, r_ref[...], preferred_element_type=jnp.float32)   # (TB, N*D)
    acc = jnp.dot(e_exp * zf, s_ref[...], preferred_element_type=jnp.float32)  # (TB, D)

    out_ref[...] = (acc * inv).astype(out_ref.dtype)
    # NOTE: beta is emitted in z.dtype (computed in f32); deliberate precision choice.
    beta_ref[...] = (e * inv).astype(beta_ref.dtype)


def _round_up(x, m):
    return ((x + m - 1) // m) * m


def attention_pallas(z, w1, b1, w2, *, block_b=1024):
    """z: (B, N, D). w1: (D, H). b1: (H,). w2: (H,) -> ((B, D), (B, N, 1)).

    block_b: max batch rows per grid step (must be a multiple of 8). The grid
    is split so there are at least 2 blocks whenever B > 8 (keeps both v7x
    TensorCores busy). Per-step VMEM is dominated by the double-buffered
    (TB, N*D) f32 block: 2*TB*N*D*4 bytes (= 2 MiB at TB=1024, N*D=256).
    """
    B, N, D = z.shape
    H = w1.shape[1]
    if block_b % 8 != 0:
        raise ValueError("block_b must be a multiple of 8")

    if B <= 8:
        TB = B                                   # single full block (legal: equals full dim)
    else:
        # >= 2 grid blocks so both TensorCores get work on v7x; cap at block_b.
        TB = min(block_b, _round_up(pl.cdiv(B, 2), 8))
    grid = (pl.cdiv(B, TB),)

    f32 = jnp.float32
    # Lane-dense flattened input (free, contiguous reshape in HBM).
    zf = z.reshape(B, N * D)
    # Constant block-structured parameter matrices (built once, resident in VMEM).
    w1b = jnp.kron(jnp.eye(N, dtype=f32), w1.astype(f32))                # (N*D, N*H)
    b1t = jnp.tile(b1.astype(f32).reshape(1, H), (1, N))                 # (1, N*H)
    w2b = jnp.kron(jnp.eye(N, dtype=f32), w2.astype(f32).reshape(H, 1))  # (N*H, N)
    r_mat = jnp.kron(jnp.eye(N, dtype=f32), jnp.ones((1, D), f32))       # (N, N*D)
    s_mat = jnp.kron(jnp.ones((N, 1), f32), jnp.eye(D, dtype=f32))       # (N*D, D)

    out, beta = pl.pallas_call(
        attention_kernel,
        out_shape=(
            jax.ShapeDtypeStruct((B, D), z.dtype),
            jax.ShapeDtypeStruct((B, N), z.dtype),
        ),
        grid_spec=pltpu.PrefetchScalarGridSpec(
            num_scalar_prefetch=0,
            grid=grid,
            in_specs=[
                pl.BlockSpec((TB, N * D), lambda b: (b, 0)),      # zf batch block
                pl.BlockSpec((N * D, N * H), lambda b: (0, 0)),   # w1b (resident)
                pl.BlockSpec((1, N * H), lambda b: (0, 0)),       # b1t (resident)
                pl.BlockSpec((N * H, N), lambda b: (0, 0)),       # w2b (resident)
                pl.BlockSpec((N, N * D), lambda b: (0, 0)),       # R   (resident)
                pl.BlockSpec((N * D, D), lambda b: (0, 0)),       # S   (resident)
            ],
            out_specs=[
                pl.BlockSpec((TB, D), lambda b: (b, 0)),
                pl.BlockSpec((TB, N), lambda b: (b, 0)),
            ],
        ),
        compiler_params=pltpu.CompilerParams(
            dimension_semantics=("parallel",),   # batch blocks shard across TCs (v7x)
        ),
    )(zf, w1b, b1t, w2b, r_mat, s_mat)

    # Free layout plumbing: restore the trailing size-1 dim of beta.
    return out, beta.reshape(B, N, 1)


def attention_ref(z, w1, b1, w2):
    """Pure-JAX reference mirroring the PyTorch forward."""
    h = jnp.tanh(jnp.einsum("bnd,dh->bnh", z, w1) + b1)       # (B, N, H)
    logits = jnp.einsum("bnh,h->bn", h, w2)[..., None]        # (B, N, 1)
    beta = jax.nn.softmax(logits, axis=1)                     # softmax over views
    out = jnp.sum(beta * z, axis=1)                           # (B, D)
    return out, beta


if __name__ == "__main__":
    key = jax.random.PRNGKey(0)
    kz, kw1, kb1, kw2, kz2, kz3 = jax.random.split(key, 6)

    # Small shapes consistent with the module: batch=2, views=8, in_size=32, hidden=16.
    B, N, D, H = 2, 8, 32, 16
    z = jax.random.normal(kz, (B, N, D), dtype=jnp.float32)
    w1 = jax.random.normal(kw1, (D, H), dtype=jnp.float32) * 0.1   # Linear(in,hid).weight^T
    b1 = jax.random.normal(kb1, (H,), dtype=jnp.float32) * 0.1     # Linear(in,hid).bias
    w2 = jax.random.normal(kw2, (H,), dtype=jnp.float32) * 0.1     # Linear(hid,1,no bias).weight

    out, beta = attention_pallas(z, w1, b1, w2)
    jax.block_until_ready((out, beta))

    out_ref, beta_ref = attention_ref(z, w1, b1, w2)
    assert out.shape == (B, D) and beta.shape == (B, N, 1)
    assert jnp.allclose(out, out_ref, atol=1e-5, rtol=1e-5)
    assert jnp.allclose(beta, beta_ref, atol=1e-5, rtol=1e-5)

    # Multi-block grid path (even split: 2 blocks of 24 rows).
    B2 = 48
    z2 = jax.random.normal(kz2, (B2, N, D), dtype=jnp.float32)
    out2, beta2 = attention_pallas(z2, w1, b1, w2)
    jax.block_until_ready((out2, beta2))
    out2_ref, beta2_ref = attention_ref(z2, w1, b1, w2)
    assert jnp.allclose(out2, out2_ref, atol=1e-5, rtol=1e-5)
    assert jnp.allclose(beta2, beta2_ref, atol=1e-5, rtol=1e-5)

    # Partial-last-block path (3 blocks of 16, last one half full).
    B3 = 40
    z3 = jax.random.normal(kz3, (B3, N, D), dtype=jnp.float32)
    out3, beta3 = attention_pallas(z3, w1, b1, w2, block_b=16)
    jax.block_until_ready((out3, beta3))
    out3_ref, beta3_ref = attention_ref(z3, w1, b1, w2)
    assert jnp.allclose(out3, out3_ref, atol=1e-5, rtol=1e-5)
    assert jnp.allclose(beta3, beta3_ref, atol=1e-5, rtol=1e-5)

    print("KERNEL_OK")
</pallas_src>

<mosaic_0001>
module attributes {stable_mosaic.version = 11 : i64} {
  func.func @attention_kernel(%arg0: i32, %arg1: memref<2x256xf32, #tpu.memory_space<vmem>>, %arg2: memref<256x128xf32, #tpu.memory_space<vmem>>, %arg3: memref<1x128xf32, #tpu.memory_space<vmem>>, %arg4: memref<128x8xf32, #tpu.memory_space<vmem>>, %arg5: memref<8x256xf32, #tpu.memory_space<vmem>>, %arg6: memref<256x32xf32, #tpu.memory_space<vmem>>, %arg7: memref<2x32xf32, #tpu.memory_space<vmem>>, %arg8: memref<2x8xf32, #tpu.memory_space<vmem>>) attributes {dimension_semantics = [#tpu.dimension_semantics<parallel>], iteration_bounds = array<i64: 1>, scalar_prefetch = 0 : i64, scratch_operands = 0 : i64, tpu.core_type = #tpu.core_type<tc>, window_params = [{transform_indices = @transform_0, window_bounds = array<i64: 2, 256>}, {pipeline_mode = #tpu.pipeline_mode<synchronous>, transform_indices = @transform_1, window_bounds = array<i64: 256, 128>}, {pipeline_mode = #tpu.pipeline_mode<synchronous>, transform_indices = @transform_2, window_bounds = array<i64: 1, 128>}, {pipeline_mode = #tpu.pipeline_mode<synchronous>, transform_indices = @transform_3, window_bounds = array<i64: 128, 8>}, {pipeline_mode = #tpu.pipeline_mode<synchronous>, transform_indices = @transform_4, window_bounds = array<i64: 8, 256>}, {pipeline_mode = #tpu.pipeline_mode<synchronous>, transform_indices = @transform_5, window_bounds = array<i64: 256, 32>}, {transform_indices = @transform_6, window_bounds = array<i64: 2, 32>}, {transform_indices = @transform_7, window_bounds = array<i64: 2, 8>}]} {
    %c0 = arith.constant 0 : index
    %c0_0 = arith.constant 0 : index
    %0 = vector.load %arg1[%c0, %c0_0] : memref<2x256xf32, #tpu.memory_space<vmem>>, vector<2x256xf32>
    %c0_1 = arith.constant 0 : index
    %c0_2 = arith.constant 0 : index
    %1 = vector.load %arg2[%c0_1, %c0_2] : memref<256x128xf32, #tpu.memory_space<vmem>>, vector<256x128xf32>
    %cst = arith.constant dense<0.000000e+00> : vector<2x128xf32>
    %2 = tpu.matmul %0, %1, %cst {dimension_numbers = #tpu.dot_dimension_numbers<[1], [0], [0], [1], [0, 0, 1, 1], [], []>} : vector<2x256xf32>, vector<256x128xf32>, vector<2x128xf32> -> vector<2x128xf32>
    %c0_3 = arith.constant 0 : index
    %c0_4 = arith.constant 0 : index
    %3 = vector.load %arg3[%c0_3, %c0_4] : memref<1x128xf32, #tpu.memory_space<vmem>>, vector<1x128xf32>
    %4 = vector.broadcast %3 : vector<1x128xf32> to vector<2x128xf32>
    %5 = arith.addf %2, %4 : vector<2x128xf32>
    %6 = math.tanh %5 : vector<2x128xf32>
    %c0_5 = arith.constant 0 : index
    %c0_6 = arith.constant 0 : index
    %7 = vector.load %arg4[%c0_5, %c0_6] : memref<128x8xf32, #tpu.memory_space<vmem>>, vector<128x8xf32>
    %cst_7 = arith.constant dense<0.000000e+00> : vector<2x8xf32>
    %8 = tpu.matmul %6, %7, %cst_7 {dimension_numbers = #tpu.dot_dimension_numbers<[1], [0], [0], [1], [0, 0, 1, 1], [], []>} : vector<2x128xf32>, vector<128x8xf32>, vector<2x8xf32> -> vector<2x8xf32>
    %cst_8 = arith.constant dense<0xFF800000> : vector<2xf32>
    %9 = vector.multi_reduction <maximumf>, %8, %cst_8 [1] : vector<2x8xf32> to vector<2xf32>
    %10 = vector.shape_cast %9 : vector<2xf32> to vector<2x1xf32>
    %11 = vector.broadcast %10 : vector<2x1xf32> to vector<2x8xf32>
    %12 = arith.subf %8, %11 : vector<2x8xf32>
    %13 = math.exp %12 : vector<2x8xf32>
    %cst_9 = arith.constant dense<0.000000e+00> : vector<2xf32>
    %14 = vector.multi_reduction <add>, %13, %cst_9 [1] : vector<2x8xf32> to vector<2xf32>
    %15 = vector.shape_cast %14 : vector<2xf32> to vector<2x1xf32>
    %16 = tpu.reciprocal %15 {approx = true} : vector<2x1xf32> -> vector<2x1xf32>
    %17 = arith.mulf %15, %16 : vector<2x1xf32>
    %cst_10 = arith.constant 2.000000e+00 : f32
    %18 = vector.broadcast %cst_10 : f32 to vector<2x1xf32>
    %19 = arith.subf %18, %17 : vector<2x1xf32>
    %20 = arith.mulf %16, %19 : vector<2x1xf32>
    %c0_11 = arith.constant 0 : index
    %c0_12 = arith.constant 0 : index
    %21 = vector.load %arg5[%c0_11, %c0_12] : memref<8x256xf32, #tpu.memory_space<vmem>>, vector<8x256xf32>
    %cst_13 = arith.constant dense<0.000000e+00> : vector<2x256xf32>
    %22 = tpu.matmul %13, %21, %cst_13 {dimension_numbers = #tpu.dot_dimension_numbers<[1], [0], [0], [1], [0, 0, 1, 1], [], []>} : vector<2x8xf32>, vector<8x256xf32>, vector<2x256xf32> -> vector<2x256xf32>
    %23 = arith.mulf %22, %0 : vector<2x256xf32>
    %c0_14 = arith.constant 0 : index
    %c0_15 = arith.constant 0 : index
    %24 = vector.load %arg6[%c0_14, %c0_15] : memref<256x32xf32, #tpu.memory_space<vmem>>, vector<256x32xf32>
    %cst_16 = arith.constant dense<0.000000e+00> : vector<2x32xf32>
    %25 = tpu.matmul %23, %24, %cst_16 {dimension_numbers = #tpu.dot_dimension_numbers<[1], [0], [0], [1], [0, 0, 1, 1], [], []>} : vector<2x256xf32>, vector<256x32xf32>, vector<2x32xf32> -> vector<2x32xf32>
    %26 = vector.broadcast %20 : vector<2x1xf32> to vector<2x32xf32>
    %27 = arith.mulf %25, %26 : vector<2x32xf32>
    %c0_17 = arith.constant 0 : index
    %c0_18 = arith.constant 0 : index
    %28 = vector.load %arg7[%c0_17, %c0_18] : memref<2x32xf32, #tpu.memory_space<vmem>>, vector<2x32xf32>
    tpu.vector_store %arg7[%c0_17, %c0_18], %27 {strides = array<i32>} : memref<2x32xf32, #tpu.memory_space<vmem>>, vector<2x32xf32>,
    %29 = vector.broadcast %20 : vector<2x1xf32> to vector<2x8xf32>
    %30 = arith.mulf %13, %29 : vector<2x8xf32>
    %c0_19 = arith.constant 0 : index
    %c0_20 = arith.constant 0 : index
    %31 = vector.load %arg8[%c0_19, %c0_20] : memref<2x8xf32, #tpu.memory_space<vmem>>, vector<2x8xf32>
    tpu.vector_store %arg8[%c0_19, %c0_20], %30 {strides = array<i32>} : memref<2x8xf32, #tpu.memory_space<vmem>>, vector<2x8xf32>,
    return
  }
  func.func @transform_0(%arg0: i32) -> (i32, i32) {
    %c0_i32 = arith.constant 0 : i32
    %c0_i32_0 = arith.constant 0 : i32
    return %arg0, %c0_i32 : i32, i32
  }
  func.func @transform_1(%arg0: i32) -> (i32, i32) {
    %c0_i32 = arith.constant 0 : i32
    %c0_i32_0 = arith.constant 0 : i32
    %c0_i32_1 = arith.constant 0 : i32
    return %c0_i32, %c0_i32_0 : i32, i32
  }
  func.func @transform_2(%arg0: i32) -> (i32, i32) {
    %c0_i32 = arith.constant 0 : i32
    %c0_i32_0 = arith.constant 0 : i32
    %c0_i32_1 = arith.constant 0 : i32
    return %c0_i32, %c0_i32_0 : i32, i32
  }
  func.func @transform_3(%arg0: i32) -> (i32, i32) {
    %c0_i32 = arith.constant 0 : i32
    %c0_i32_0 = arith.constant 0 : i32
    %c0_i32_1 = arith.constant 0 : i32
    return %c0_i32, %c0_i32_0 : i32, i32
  }
  func.func @transform_4(%arg0: i32) -> (i32, i32) {
    %c0_i32 = arith.constant 0 : i32
    %c0_i32_0 = arith.constant 0 : i32
    %c0_i32_1 = arith.constant 0 : i32
    return %c0_i32, %c0_i32_0 : i32, i32
  }
  func.func @transform_5(%arg0: i32) -> (i32, i32) {
    %c0_i32 = arith.constant 0 : i32
    %c0_i32_0 = arith.constant 0 : i32
    %c0_i32_1 = arith.constant 0 : i32
    return %c0_i32, %c0_i32_0 : i32, i32
  }
  func.func @transform_6(%arg0: i32) -> (i32, i32) {
    %c0_i32 = arith.constant 0 : i32
    %c0_i32_0 = arith.constant 0 : i32
    return %arg0, %c0_i32 : i32, i32
  }
  func.func @transform_7(%arg0: i32) -> (i32, i32) {
    %c0_i32 = arith.constant 0 : i32
    %c0_i32_0 = arith.constant 0 : i32
    return %arg0, %c0_i32 : i32, i32
  }
}

</mosaic_0001>

<llo_original>
// kernel: tpu_custom_call.1
$region0: #{tpu_custom_call.1}
  #allocation0 [shape = 'u32[]', space=smem, size = 0x4, offset = 0x4, fixed_abs, tag = 'smem constant byte address 0x4 - core index']
  #allocation1 [shape = 'u32[144,128]{1,0:T(1,128)}', space=vmem, size = 0x12000, scoped, tag = 'internal scratch']
  %s0 = inlined_call_operand.vmem [shape: f32[2,256], index: 0, kind: input, shape index: {}]
  %s1 = inlined_call_operand.vmem [shape: f32[256,128], index: 1, kind: input, shape index: {}]
  %s2 = inlined_call_operand.vmem [shape: f32[1,128], index: 2, kind: input, shape index: {}]
  %s3 = inlined_call_operand.vmem [shape: f32[128,8], index: 3, kind: input, shape index: {}]
  %s4 = inlined_call_operand.vmem [shape: f32[8,256], index: 4, kind: input, shape index: {}]
  %s5 = inlined_call_operand.vmem [shape: f32[256,32], index: 5, kind: input, shape index: {}]
  %s6 = inlined_call_operand.hbm [shape: f32[2,32], index: 6, kind: output, shape index: {0}]
  %s7 = inlined_call_operand.hbm [shape: f32[2,8], index: 7, kind: output, shape index: {1}]
  %8 = xla_tuple %s6, %s7
  %s9 = sld [smem:[#allocation0]]
  $region42: #{tpu_custom_call.1} parent=0
    _
  %s11 = ssub.s32 1, %s9
  %s12 = scalar_select 0, %s11, %s9
  $region1: #{tpu_custom_call.1} parent=0
    #allocation2 [shape = 'u8[1024]{0}', space=vmem, size = 0x400, scoped, tag = 'output window, operand 0, single buffered']
    #allocation3 [shape = 's32[1]{0}', space=sflag, size = 0x4, scoped, tag = 'scoped memory for tpu_custom_call.1']
    #allocation4 [shape = 'u8[1024]{0}', space=vmem, size = 0x400, scoped, tag = 'output window, operand 1, single buffered']
    #allocation5 [shape = 's32[1]{0}', space=sflag, size = 0x4, scoped, tag = 'scoped memory for tpu_custom_call.1']
    %13 = vsyncpa [#allocation3], 0
    %14 = vsyncpa [#allocation5], 0
    // Predicated region
    $region2: #{tpu_custom_call.1} parent=1 // pred_check
      _
    $region3: #{tpu_custom_call.1} parent=1 // pred_check_branch
      %16 = sbr.rel (0) target = $region5
    $region4: #{tpu_custom_call.1} parent=1 // pred_region
      _
    $region5: #{tpu_custom_call.1} parent=1 // pred_fallthru
      _
    // Predicated region
    $region6: #{tpu_custom_call.1} parent=1 // pred_check
      _
    $region7: #{tpu_custom_call.1} parent=1 // pred_check_branch
      %18 = sbr.rel (0) target = $region9
    $region8: #{tpu_custom_call.1} parent=1 // pred_region
      _
    $region9: #{tpu_custom_call.1} parent=1 // pred_fallthru
      _
    // Predicated region
    $region10: #{tpu_custom_call.1} parent=1 // pred_check
      _
    $region11: #{tpu_custom_call.1} parent=1 // pred_check_branch
      %20 = sbr.rel (0) target = $region13
    $region12: #{tpu_custom_call.1} parent=1 // pred_region
      _
    $region13: #{tpu_custom_call.1} parent=1 // pred_fallthru
      _
    // Predicated region
    $region14: #{tpu_custom_call.1} parent=1 // pred_check
      _
    $region15: #{tpu_custom_call.1} parent=1 // pred_check_branch
      %22 = sbr.rel (0) target = $region17
    $region16: #{tpu_custom_call.1} parent=1 // pred_region
      _
    $region17: #{tpu_custom_call.1} parent=1 // pred_fallthru
      _
    // Predicated region
    $region18: #{tpu_custom_call.1} parent=1 // pred_check
      _
    $region19: #{tpu_custom_call.1} parent=1 // pred_check_branch
      %24 = sbr.rel (0) target = $region21
    $region20: #{tpu_custom_call.1} parent=1 // pred_region
      _
    $region21: #{tpu_custom_call.1} parent=1 // pred_fallthru
      _
    // Predicated region
    $region22: #{tpu_custom_call.1} parent=1 // pred_check
      _
    $region23: #{tpu_custom_call.1} parent=1 // pred_check_branch
      %26 = sbr.rel (0) target = $region25
    $region24: #{tpu_custom_call.1} parent=1 // pred_region
      _
    $region25: #{tpu_custom_call.1} parent=1 // pred_fallthru
      _
    %v27 = vld [vmem:[%s0] sm:$0xf]
    %v28 = vld [vmem:[%s1] sm:$0xff]
    %v29 = vld [vmem:[%s1 + $0x8] sm:$0xff]
    %v30 = vld [vmem:[%s1 + $0x10] sm:$0xff]
    %v31 = vld [vmem:[%s1 + $0x18] sm:$0xff]
    %v32 = vld [vmem:[%s1 + $0x20] sm:$0xff]
    %v33 = vld [vmem:[%s1 + $0x28] sm:$0xff]
    %v34 = vld [vmem:[%s1 + $0x30] sm:$0xff]
    %v35 = vld [vmem:[%s1 + $0x38] sm:$0xff]
    %v36 = vld [vmem:[%s1 + $0x40] sm:$0xff]
    %v37 = vld [vmem:[%s1 + $0x48] sm:$0xff]
    %v38 = vld [vmem:[%s1 + $0x50] sm:$0xff]
    %v39 = vld [vmem:[%s1 + $0x58] sm:$0xff]
    %v40 = vld [vmem:[%s1 + $0x60] sm:$0xff]
    %v41 = vld [vmem:[%s1 + $0x68] sm:$0xff]
    %v42 = vld [vmem:[%s1 + $0x70] sm:$0xff]
    %v43 = vld [vmem:[%s1 + $0x78] sm:$0xff]
    %v44 = vld [vmem:[%s1 + $0x80] sm:$0xff]
    %v45 = vld [vmem:[%s1 + $0x88] sm:$0xff]
    %v46 = vld [vmem:[%s1 + $0x90] sm:$0xff]
    %v47 = vld [vmem:[%s1 + $0x98] sm:$0xff]
    %v48 = vld [vmem:[%s1 + $0xa0] sm:$0xff]
    %v49 = vld [vmem:[%s1 + $0xa8] sm:$0xff]
    %v50 = vld [vmem:[%s1 + $0xb0] sm:$0xff]
    %v51 = vld [vmem:[%s1 + $0xb8] sm:$0xff]
    %v52 = vld [vmem:[%s1 + $0xc0] sm:$0xff]
    %v53 = vld [vmem:[%s1 + $0xc8] sm:$0xff]
    %v54 = vld [vmem:[%s1 + $0xd0] sm:$0xff]
    %v55 = vld [vmem:[%s1 + $0xd8] sm:$0xff]
    %v56 = vld [vmem:[%s1 + $0xe0] sm:$0xff]
    %v57 = vld [vmem:[%s1 + $0xe8] sm:$0xff]
    %v58 = vld [vmem:[%s1 + $0xf0] sm:$0xff]
    %v59 = vld [vmem:[%s1 + $0xf8] sm:$0xff]
    %v60 = vld [vmem:[%s2] sm:$0x1]
    %v62 = vlaneseq
    %v63 = vshrl.u32 %v62, 7
    %v64 = vsub.s32 0, %v63
    %v65 = vrot.slane %v60, %v64
    %v69 = vunpack.c.l.s4 1983009808
    %v70 = vunpack.c.0.s8 %v69
    %v71 = vlaneseq
    %v72 = vshrl.u32 %v71, 7
    %v73 = vsub.s32 %v70, %v72
    %v74 = vrot.slane %v27, %v73
    %v75 = vcombine.high %v74, %v74
    %78 = vmatprep.subr.mxu0 0.0
    %79 = vmatpush1.msra.mxu0 %v28
    %80 = vmatprep.subr.mxu0 0.0
    %81 = vmatpush1.msra.mxu0 %v29
    %82 = vmatprep.subr.mxu0 0.0
    %83 = vmatpush1.msra.mxu0 %v30
    %84 = vmatprep.subr.mxu0 0.0
    %85 = vmatpush1.msra.mxu0 %v31
    %86 = vmatprep.subr.mxu0 0.0
    %87 = vmatpush1.msra.mxu0 %v32
    %88 = vmatprep.subr.mxu0 0.0
    %89 = vmatpush1.msra.mxu0 %v33
    %90 = vmatprep.subr.mxu0 0.0
    %91 = vmatpush1.msra.mxu0 %v34
    %92 = vmatprep.subr.mxu0 0.0
    %93 = vmatpush1.msra.mxu0 %v35
    %94 = vmatprep.subr.mxu0 0.0
    %95 = vmatpush1.msra.mxu0 %v36
    %96 = vmatprep.subr.mxu0 0.0
    %97 = vmatpush1.msra.mxu0 %v37
    %98 = vmatprep.subr.mxu0 0.0
    %99 = vmatpush1.msra.mxu0 %v38
    %100 = vmatprep.subr.mxu0 0.0
    %101 = vmatpush1.msra.mxu0 %v39
    %102 = vmatprep.subr.mxu0 0.0
    %103 = vmatpush1.msra.mxu0 %v40
    %104 = vmatprep.subr.mxu0 0.0
    %105 = vmatpush1.msra.mxu0 %v41
    %106 = vmatprep.subr.mxu0 0.0
    %107 = vmatpush1.msra.mxu0 %v42
    %108 = vmatprep.subr.mxu0 0.0
    %109 = vmatpush1.msra.mxu0 %v43
    %110 = vmatprep.subr.mxu0 0.0
    %111 = vmatpush1.msra.mxu0 %v44
    %112 = vmatprep.subr.mxu0 0.0
    %113 = vmatpush1.msra.mxu0 %v45
    %114 = vmatprep.subr.mxu0 0.0
    %115 = vmatpush1.msra.mxu0 %v46
    %116 = vmatprep.subr.mxu0 0.0
    %117 = vmatpush1.msra.mxu0 %v47
    %118 = vmatprep.subr.mxu0 0.0
    %119 = vmatpush1.msra.mxu0 %v48
    %120 = vmatprep.subr.mxu0 0.0
    %121 = vmatpush1.msra.mxu0 %v49
    %122 = vmatprep.subr.mxu0 0.0
    %123 = vmatpush1.msra.mxu0 %v50
    %124 = vmatprep.subr.mxu0 0.0
    %125 = vmatpush1.msra.mxu0 %v51
    %126 = vmatprep.subr.mxu0 0.0
    %127 = vmatpush1.msra.mxu0 %v52
    %128 = vmatprep.subr.mxu0 0.0
    %129 = vmatpush1.msra.mxu0 %v53
    %130 = vmatprep.subr.mxu0 0.0
    %131 = vmatpush1.msra.mxu0 %v54
    %132 = vmatprep.subr.mxu0 0.0
    %133 = vmatpush1.msra.mxu0 %v55
    %134 = vmatprep.subr.mxu0 0.0
    %135 = vmatpush1.msra.mxu0 %v56
    %136 = vmatprep.subr.mxu0 0.0
    %137 = vmatpush1.msra.mxu0 %v57
    %138 = vmatprep.subr.mxu0 0.0
    %139 = vmatpush1.msra.mxu0 %v58
    %140 = vmatprep.subr.mxu0 0.0
    %141 = vmatpush1.msra.mxu0 %v59
    %142 = vmatprep.mubr.f32.mxu0 %v75
    %143 = vmatmul.mubr.f32.gmra.mrb[0].mxu0 %v74
    %v144 = vpop.f32.mrb[0].mxu0
    %v145 = vadd.f32 %v65, %v144
    %v146 = vpop.f32.mrb[0].mxu0
    %147 = vdwg.mxu0
    %v148 = vtanh.pop %v145
    %v149 = vld [vmem:[%s3] sm:$0xff]
    %v150 = vld [vmem:[%s3 + $0x8] sm:$0xff]
    %v151 = vld [vmem:[%s3 + $0x10] sm:$0xff]
    %v152 = vld [vmem:[%s3 + $0x18] sm:$0xff]
    %v153 = vld [vmem:[%s3 + $0x20] sm:$0xff]
    %v154 = vld [vmem:[%s3 + $0x28] sm:$0xff]
    %v155 = vld [vmem:[%s3 + $0x30] sm:$0xff]
    %v156 = vld [vmem:[%s3 + $0x38] sm:$0xff]
    %v157 = vld [vmem:[%s3 + $0x40] sm:$0xff]
    %v158 = vld [vmem:[%s3 + $0x48] sm:$0xff]
    %v159 = vld [vmem:[%s3 + $0x50] sm:$0xff]
    %v160 = vld [vmem:[%s3 + $0x58] sm:$0xff]
    %v161 = vld [vmem:[%s3 + $0x60] sm:$0xff]
    %v162 = vld [vmem:[%s3 + $0x68] sm:$0xff]
    %v163 = vld [vmem:[%s3 + $0x70] sm:$0xff]
    %v164 = vld [vmem:[%s3 + $0x78] sm:$0xff]
    %165 = vmatprep.subr.mxu0 0.0
    %166 = vmatpush1.msra.mxu0 %v149
    %167 = vmatprep.subr.mxu0 0.0
    %168 = vmatpush1.msra.mxu0 %v150
    %169 = vmatprep.subr.mxu0 0.0
    %170 = vmatpush1.msra.mxu0 %v151
    %171 = vmatprep.subr.mxu0 0.0
    %172 = vmatpush1.msra.mxu0 %v152
    %173 = vmatprep.subr.mxu0 0.0
    %174 = vmatpush1.msra.mxu0 %v153
    %175 = vmatprep.subr.mxu0 0.0
    %176 = vmatpush1.msra.mxu0 %v154
    %177 = vmatprep.subr.mxu0 0.0
    %178 = vmatpush1.msra.mxu0 %v155
    %179 = vmatprep.subr.mxu0 0.0
    %180 = vmatpush1.msra.mxu0 %v156
    %181 = vmatprep.subr.mxu0 0.0
    %182 = vmatpush1.msra.mxu0 %v157
    %183 = vmatprep.subr.mxu0 0.0
    %184 = vmatpush1.msra.mxu0 %v158
    %185 = vmatprep.subr.mxu0 0.0
    %186 = vmatpush1.msra.mxu0 %v159
    %187 = vmatprep.subr.mxu0 0.0
    %188 = vmatpush1.msra.mxu0 %v160
    %189 = vmatprep.subr.mxu0 0.0
    %190 = vmatpush1.msra.mxu0 %v161
    %191 = vmatprep.subr.mxu0 0.0
    %192 = vmatpush1.msra.mxu0 %v162
    %193 = vmatprep.subr.mxu0 0.0
    %194 = vmatpush1.msra.mxu0 %v163
    %195 = vmatprep.subr.mxu0 0.0
    %196 = vmatpush1.msra.mxu0 %v164
    %197 = vmatprep.subr.mxu0 0.0
    %198 = vmatpush1.msra.mxu0 0.0
    %199 = vmatprep.subr.mxu0 0.0
    %200 = vmatpush1.msra.mxu0 0.0
    %201 = vmatprep.subr.mxu0 0.0
    %202 = vmatpush1.msra.mxu0 0.0
    %203 = vmatprep.subr.mxu0 0.0
    %204 = vmatpush1.msra.mxu0 0.0
    %205 = vmatprep.subr.mxu0 0.0
    %206 = vmatpush1.msra.mxu0 0.0
    %207 = vmatprep.subr.mxu0 0.0
    %208 = vmatpush1.msra.mxu0 0.0
    %209 = vmatprep.subr.mxu0 0.0
    %210 = vmatpush1.msra.mxu0 0.0
    %211 = vmatprep.subr.mxu0 0.0
    %212 = vmatpush1.msra.mxu0 0.0
    %213 = vmatprep.subr.mxu0 0.0
    %214 = vmatpush1.msra.mxu0 0.0
    %215 = vmatprep.subr.mxu0 0.0
    %216 = vmatpush1.msra.mxu0 0.0
    %217 = vmatprep.subr.mxu0 0.0
    %218 = vmatpush1.msra.mxu0 0.0
    %219 = vmatprep.subr.mxu0 0.0
    %220 = vmatpush1.msra.mxu0 0.0
    %221 = vmatprep.subr.mxu0 0.0
    %222 = vmatpush1.msra.mxu0 0.0
    %223 = vmatprep.subr.mxu0 0.0
    %224 = vmatpush1.msra.mxu0 0.0
    %225 = vmatprep.subr.mxu0 0.0
    %226 = vmatpush1.msra.mxu0 0.0
    %227 = vmatprep.subr.mxu0 0.0
    %228 = vmatpush1.msra.mxu0 0.0
    %229 = vmatprep.mubr.f32.mxu0 0.0
    %230 = vmatmul.mubr.f32.gmra.mrb[0].mxu0 %v148
    %v231 = vpop.f32.mrb[0].mxu0
    %v232 = vadd.f32 0.0, %v231
    %v233 = vpop.f32.mrb[0].mxu0
    %234 = vdwg.mxu0
    %vm235 = vcmask 58368
    %v236 = vsel %vm235, %v232, -inf
    %237 = vmax.xlane.f32.xlu0 %v236
    %v238 = vpop.xlane.xlu0 %237
    %v239 = vsub.f32 %v232, %v238
    %v240 = vmul.f32 %v239, 1.442695
    %v241 = vpow.pop %v240
    %v242 = vsel %vm235, %v241, 0.0
    %243 = vadd.xlane.f32.xlu0 %v242
    %v244 = vpop.xlane.xlu0 %243
    %v245 = vrcp.pop %v244
    %v246 = vmul.f32 %v244, %v245
    %v247 = vsub.f32 2.0, %v246
    %v248 = vmul.f32 %v245, %v247
    %v249 = vld [vmem:[%s4] sm:$0xff]
    %v250 = vld [vmem:[%s4 + $0x8] sm:$0xff]
    %vm251 = vcmask 64512
    %v253 = vsel %vm251, %v241, 0
    %255 = vmatprep.subr.mxu0 %v250
    %256 = vmatpush1.msra.mxu0 %v249
    %257 = vmatprep.subr.mxu0 0.0
    %258 = vmatpush1.msra.mxu0 0.0
    %259 = vmatprep.subr.mxu0 0.0
    %260 = vmatpush1.msra.mxu0 0.0
    %261 = vmatprep.subr.mxu0 0.0
    %262 = vmatpush1.msra.mxu0 0.0
    %263 = vmatprep.subr.mxu0 0.0
    %264 = vmatpush1.msra.mxu0 0.0
    %265 = vmatprep.subr.mxu0 0.0
    %266 = vmatpush1.msra.mxu0 0.0
    %267 = vmatprep.subr.mxu0 0.0
    %268 = vmatpush1.msra.mxu0 0.0
    %269 = vmatprep.subr.mxu0 0.0
    %270 = vmatpush1.msra.mxu0 0.0
    %271 = vmatprep.subr.mxu0 0.0
    %272 = vmatpush1.msra.mxu0 0.0
    %273 = vmatprep.subr.mxu0 0.0
    %274 = vmatpush1.msra.mxu0 0.0
    %275 = vmatprep.subr.mxu0 0.0
    %276 = vmatpush1.msra.mxu0 0.0
    %277 = vmatprep.subr.mxu0 0.0
    %278 = vmatpush1.msra.mxu0 0.0
    %279 = vmatprep.subr.mxu0 0.0
    %280 = vmatpush1.msra.mxu0 0.0
    %281 = vmatprep.subr.mxu0 0.0
    %282 = vmatpush1.msra.mxu0 0.0
    %283 = vmatprep.subr.mxu0 0.0
    %284 = vmatpush1.msra.mxu0 0.0
    %285 = vmatprep.subr.mxu0 0.0
    %286 = vmatpush1.msra.mxu0 0.0
    %287 = vmatprep.subr.mxu0 0.0
    %288 = vmatpush1.msra.mxu0 0.0
    %289 = vmatprep.subr.mxu0 0.0
    %290 = vmatpush1.msra.mxu0 0.0
    %291 = vmatprep.subr.mxu0 0.0
    %292 = vmatpush1.msra.mxu0 0.0
    %293 = vmatprep.subr.mxu0 0.0
    %294 = vmatpush1.msra.mxu0 0.0
    %295 = vmatprep.subr.mxu0 0.0
    %296 = vmatpush1.msra.mxu0 0.0
    %297 = vmatprep.subr.mxu0 0.0
    %298 = vmatpush1.msra.mxu0 0.0
    %299 = vmatprep.subr.mxu0 0.0
    %300 = vmatpush1.msra.mxu0 0.0
    %301 = vmatprep.subr.mxu0 0.0
    %302 = vmatpush1.msra.mxu0 0.0
    %303 = vmatprep.subr.mxu0 0.0
    %304 = vmatpush1.msra.mxu0 0.0
    %305 = vmatprep.subr.mxu0 0.0
    %306 = vmatpush1.msra.mxu0 0.0
    %307 = vmatprep.subr.mxu0 0.0
    %308 = vmatpush1.msra.mxu0 0.0
    %309 = vmatprep.subr.mxu0 0.0
    %310 = vmatpush1.msra.mxu0 0.0
    %311 = vmatprep.subr.mxu0 0.0
    %312 = vmatpush1.msra.mxu0 0.0
    %313 = vmatprep.subr.mxu0 0.0
    %314 = vmatpush1.msra.mxu0 0.0
    %315 = vmatprep.subr.mxu0 0.0
    %316 = vmatpush1.msra.mxu0 0.0
    %317 = vmatprep.subr.mxu0 0.0
    %318 = vmatpush1.msra.mxu0 0.0
    %319 = vmatprep.mubr.f32.mxu0 0.0
    %320 = vmatmul.mubr.f32.gmra.mrb[0].mxu0 %v253
    %v321 = vpop.f32.mrb[0].mxu0
    %v322 = vadd.f32 0.0, %v321
    %v323 = vpop.f32.mrb[0].mxu0
    %v324 = vadd.f32 0.0, %v323
    %325 = vdwg.mxu0
    %v326 = vmul.f32 %v322, %v74
    %v327 = vmul.f32 %v324, %v75
    %v328 = vld [vmem:[%s5] sm:$0xff]
    %v329 = vld [vmem:[%s5 + $0x8] sm:$0xff]
    %v330 = vld [vmem:[%s5 + $0x10] sm:$0xff]
    %v331 = vld [vmem:[%s5 + $0x18] sm:$0xff]
    %v332 = vld [vmem:[%s5 + $0x20] sm:$0xff]
    %v333 = vld [vmem:[%s5 + $0x28] sm:$0xff]
    %v334 = vld [vmem:[%s5 + $0x30] sm:$0xff]
    %v335 = vld [vmem:[%s5 + $0x38] sm:$0xff]
    %v336 = vld [vmem:[%s5 + $0x40] sm:$0xff]
    %v337 = vld [vmem:[%s5 + $0x48] sm:$0xff]
    %v338 = vld [vmem:[%s5 + $0x50] sm:$0xff]
    %v339 = vld [vmem:[%s5 + $0x58] sm:$0xff]
    %v340 = vld [vmem:[%s5 + $0x60] sm:$0xff]
    %v341 = vld [vmem:[%s5 + $0x68] sm:$0xff]
    %v342 = vld [vmem:[%s5 + $0x70] sm:$0xff]
    %v343 = vld [vmem:[%s5 + $0x78] sm:$0xff]
    %v344 = vld [vmem:[%s5 + $0x80] sm:$0xff]
    %v345 = vld [vmem:[%s5 + $0x88] sm:$0xff]
    %v346 = vld [vmem:[%s5 + $0x90] sm:$0xff]
    %v347 = vld [vmem:[%s5 + $0x98] sm:$0xff]
    %v348 = vld [vmem:[%s5 + $0xa0] sm:$0xff]
    %v349 = vld [vmem:[%s5 + $0xa8] sm:$0xff]
    %v350 = vld [vmem:[%s5 + $0xb0] sm:$0xff]
    %v351 = vld [vmem:[%s5 + $0xb8] sm:$0xff]
    %v352 = vld [vmem:[%s5 + $0xc0] sm:$0xff]
    %v353 = vld [vmem:[%s5 + $0xc8] sm:$0xff]
    %v354 = vld [vmem:[%s5 + $0xd0] sm:$0xff]
    %v355 = vld [vmem:[%s5 + $0xd8] sm:$0xff]
    %v356 = vld [vmem:[%s5 + $0xe0] sm:$0xff]
    %v357 = vld [vmem:[%s5 + $0xe8] sm:$0xff]
    %v358 = vld [vmem:[%s5 + $0xf0] sm:$0xff]
    %v359 = vld [vmem:[%s5 + $0xf8] sm:$0xff]
    %360 = vmatprep.subr.mxu0 0.0
    %361 = vmatpush1.msra.mxu0 %v328
    %362 = vmatprep.subr.mxu0 0.0
    %363 = vmatpush1.msra.mxu0 %v329
    %364 = vmatprep.subr.mxu0 0.0
    %365 = vmatpush1.msra.mxu0 %v330
    %366 = vmatprep.subr.mxu0 0.0
    %367 = vmatpush1.msra.mxu0 %v331
    %368 = vmatprep.subr.mxu0 0.0
    %369 = vmatpush1.msra.mxu0 %v332
    %370 = vmatprep.subr.mxu0 0.0
    %371 = vmatpush1.msra.mxu0 %v333
    %372 = vmatprep.subr.mxu0 0.0
    %373 = vmatpush1.msra.mxu0 %v334
    %374 = vmatprep.subr.mxu0 0.0
    %375 = vmatpush1.msra.mxu0 %v335
    %376 = vmatprep.subr.mxu0 0.0
    %377 = vmatpush1.msra.mxu0 %v336
    %378 = vmatprep.subr.mxu0 0.0
    %379 = vmatpush1.msra.mxu0 %v337
    %380 = vmatprep.subr.mxu0 0.0
    %381 = vmatpush1.msra.mxu0 %v338
    %382 = vmatprep.subr.mxu0 0.0
    %383 = vmatpush1.msra.mxu0 %v339
    %384 = vmatprep.subr.mxu0 0.0
    %385 = vmatpush1.msra.mxu0 %v340
    %386 = vmatprep.subr.mxu0 0.0
    %387 = vmatpush1.msra.mxu0 %v341
    %388 = vmatprep.subr.mxu0 0.0
    %389 = vmatpush1.msra.mxu0 %v342
    %390 = vmatprep.subr.mxu0 0.0
    %391 = vmatpush1.msra.mxu0 %v343
    %392 = vmatprep.subr.mxu0 0.0
    %393 = vmatpush1.msra.mxu0 %v344
    %394 = vmatprep.subr.mxu0 0.0
    %395 = vmatpush1.msra.mxu0 %v345
    %396 = vmatprep.subr.mxu0 0.0
    %397 = vmatpush1.msra.mxu0 %v346
    %398 = vmatprep.subr.mxu0 0.0
    %399 = vmatpush1.msra.mxu0 %v347
    %400 = vmatprep.subr.mxu0 0.0
    %401 = vmatpush1.msra.mxu0 %v348
    %402 = vmatprep.subr.mxu0 0.0
    %403 = vmatpush1.msra.mxu0 %v349
    %404 = vmatprep.subr.mxu0 0.0
    %405 = vmatpush1.msra.mxu0 %v350
    %406 = vmatprep.subr.mxu0 0.0
    %407 = vmatpush1.msra.mxu0 %v351
    %408 = vmatprep.subr.mxu0 0.0
    %409 = vmatpush1.msra.mxu0 %v352
    %410 = vmatprep.subr.mxu0 0.0
    %411 = vmatpush1.msra.mxu0 %v353
    %412 = vmatprep.subr.mxu0 0.0
    %413 = vmatpush1.msra.mxu0 %v354
    %414 = vmatprep.subr.mxu0 0.0
    %415 = vmatpush1.msra.mxu0 %v355
    %416 = vmatprep.subr.mxu0 0.0
    %417 = vmatpush1.msra.mxu0 %v356
    %418 = vmatprep.subr.mxu0 0.0
    %419 = vmatpush1.msra.mxu0 %v357
    %420 = vmatprep.subr.mxu0 0.0
    %421 = vmatpush1.msra.mxu0 %v358
    %422 = vmatprep.subr.mxu0 0.0
    %423 = vmatpush1.msra.mxu0 %v359
    %424 = vmatprep.mubr.f32.mxu0 %v327
    %425 = vmatmul.mubr.f32.gmra.mrb[0].mxu0 %v326
    %v426 = vpop.f32.mrb[0].mxu0
    %v427 = vadd.f32 0.0, %v426
    %v428 = vpop.f32.mrb[0].mxu0
    %429 = vdwg.mxu0
    %v430 = vmul.f32 %v427, %v248
    %vm431 = vcmask 254976
    %432 = vst.msk [vmem:[#allocation2] sm:$0x3] %vm431, %v430
    %v433 = vmul.f32 %v241, %v248
    %434 = vst.msk [vmem:[#allocation4] sm:$0x3] %vm235, %v433
    // Predicated region
    $region26: #{tpu_custom_call.1} parent=1 // pred_check
      _
    $region27: #{tpu_custom_call.1} parent=1 // pred_check_branch
      %436 = sbr.rel (0) target = $region29
    $region28: #{tpu_custom_call.1} parent=1 // pred_region
      %s438 = ssub.s32 32, 32
      %439 = vsyncadd [#allocation3], %s438
      %s441 = sshll.u32 [#allocation2], 4
      %s442 = int_to_ptr.vmem [resolvable:$true] %s441
      %444 = dma.vmem_to_hbm [thread:$0]  %s442, 32, %s6, [#allocation3]
    $region29: #{tpu_custom_call.1} parent=1 // pred_fallthru
      _
    // Predicated region
    $region30: #{tpu_custom_call.1} parent=1 // pred_check
      _
    $region31: #{tpu_custom_call.1} parent=1 // pred_check_branch
      %446 = sbr.rel (0) target = $region33
    $region32: #{tpu_custom_call.1} parent=1 // pred_region
      %s448 = ssub.s32 32, 32
      %449 = vsyncadd [#allocation5], %s448
      %s451 = sshll.u32 [#allocation4], 4
      %s452 = int_to_ptr.vmem [resolvable:$true] %s451
      %454 = dma.vmem_to_hbm [thread:$0]  %s452, 32, %s7, [#allocation5]
    $region33: #{tpu_custom_call.1} parent=1 // pred_fallthru
      _
    // Predicated region
    $region34: #{tpu_custom_call.1} parent=1 // pred_check
      _
    $region35: #{tpu_custom_call.1} parent=1 // pred_check_branch
      %456 = sbr.rel (0) target = $region37
    $region36: #{tpu_custom_call.1} parent=1 // pred_region
      %457 = dma.done [#allocation3], 32
    $region37: #{tpu_custom_call.1} parent=1 // pred_fallthru
      _
    // Predicated region
    $region38: #{tpu_custom_call.1} parent=1 // pred_check
      _
    $region39: #{tpu_custom_call.1} parent=1 // pred_check_branch
      %459 = sbr.rel (0) target = $region41
    $region40: #{tpu_custom_call.1} parent=1 // pred_region
      %460 = dma.done [#allocation5], 32
    $region41: #{tpu_custom_call.1} parent=1 // pred_fallthru
      _
    %461 = vsyncpa [#allocation3], 1
    %462 = vsyncpa [#allocation5], 1

</llo_original>
